<compile_context>
chip_gen: v5e
topology: v5e:2x2
jax: 0.10.0
libtpu: 0.0.40
codegen_flags: <defaults>
</compile_context>

<pallas_src>
import functools

import jax
import jax.numpy as jnp
from jax.experimental import pallas as pl
from jax.experimental.pallas import tpu as pltpu


# ----------------------------------------------------------------------------
# Kernel
# ----------------------------------------------------------------------------
def _rescale2d_q_kernel(x_ref, w_ref, b_ref, o_ref, *, qmin, qmax, inv_step,
                        quantize):
    x = x_ref[...]            # (tile_r, tile_hw)
    w = w_ref[...]            # (tile_r, 1)  pre-quantized (and step-folded)
    b = b_ref[...]            # (tile_r, 1)  pre-quantized
    if quantize:
        # q(x) * q(w) == clip(round(x/step), qmin, qmax) * (q(w)*step); the
        # "* step" was folded into w in the wrapper (exact: step is 2^k).
        xq = jnp.clip(jnp.round(x * inv_step), qmin, qmax)
        o_ref[...] = xq * w + b
    else:
        o_ref[...] = x * w + b


# ----------------------------------------------------------------------------
# Tiling helpers
# ----------------------------------------------------------------------------
_MIN_LANE_TILE = 512     # keep lane blocks >= 512 for DMA efficiency
_TARGET_BLOCKS = 8       # aim for >= 8 grid steps on large tensors


def _round_up(x, m):
    return (x + m - 1) // m * m


def _block_budget_bytes():
    """Per-block f32 budget, per generation.  Double-buffered in + out blocks
    are ~4x this, which must stay well under the scoped VMEM limit."""
    try:
        info = pltpu.get_tpu_info()
        vmem = getattr(info, "vmem_capacity_bytes", None)
        if vmem is not None and vmem >= 96 * 1024 * 1024:
            return 4 * 1024 * 1024          # v5e / v6e: 128 MiB physical VMEM
    except Exception:
        pass
    return 2 * 1024 * 1024                  # v7x (64 MiB / TC) and fallback


def _choose_tiles(R, HW):
    """Pick (tile_r, tile_hw).  Each dim is either a multiple of (8, 128) or
    equal to the full array dim (no wrapper padding needed); the block stays
    within the per-generation budget; for large tensors the grid has at least
    ~_TARGET_BLOCKS steps (pipelining + megacore sharding), split along rows
    first so interior stores stay lane-dense."""
    max_elems = _block_budget_bytes() // 4

    # Lane tile: whole row when it fits next to >= 8 sublanes (contiguous
    # row-strip DMAs, no interior lane masking); otherwise the largest
    # 128-multiple that fits the budget.
    if HW * min(R, 8) <= max_elems or HW <= 128:
        tile_hw = HW
    else:
        tile_hw = max(128, ((max_elems // 8) // 128) * 128)
        tile_hw = min(tile_hw, max(128, (HW // 128) * 128))

    # Row tile: as many 8-row groups as the budget allows (or the full dim).
    max_rows = max(8, ((max_elems // tile_hw) // 8) * 8)
    tile_r = R if R <= max_rows else max_rows

    def n_blocks(tr, thw):
        return pl.cdiv(R, tr) * pl.cdiv(HW, thw)

    # Ensure enough grid steps for DMA/compute overlap and >= 2 row blocks for
    # v7x megacore, when the tensor is large enough to allow it.
    while n_blocks(tile_r, tile_hw) < _TARGET_BLOCKS and tile_r > 8:
        new_tr = _round_up(pl.cdiv(tile_r, 2), 8)
        if new_tr >= tile_r:
            break
        tile_r = new_tr
    while (n_blocks(tile_r, tile_hw) < _TARGET_BLOCKS
           and tile_hw % 128 == 0 and tile_hw >= 2 * _MIN_LANE_TILE):
        tile_hw = _round_up(pl.cdiv(tile_hw, 2), 128)

    return tile_r, tile_hw


def _dfxp_quantize(v, qmin, qmax, step):
    return jnp.clip(jnp.round(v / step), qmin, qmax) * step


# ----------------------------------------------------------------------------
# Public wrapper
# ----------------------------------------------------------------------------
def rescale2d_q(x, weight, bias, *, bits, step=2.0 ** (-5)):
    """x: (N, C, H, W) float32; weight/bias: (C, 1, 1) float32."""
    N, C, H, W = x.shape
    HW = H * W
    R = N * C

    qmin = -(2.0 ** (bits - 1))
    qmax = 2.0 ** (bits - 1) - 1.0
    quantize = bits != 32

    # Pre-quantize the C-element parameters in plain XLA (trivially cheap).
    w = weight.reshape(C)
    b = bias.reshape(C)
    if quantize:
        w = _dfxp_quantize(w, qmin, qmax, step)
        b = _dfxp_quantize(b, qmin, qmax, step)
        # Fold the activation quantizer's trailing "* step" into the weight.
        w = w * step

    # Per-row (N*C, 1) params: rows of the 2-D view are (n, c) pairs.
    w2 = jnp.tile(w[None, :], (N, 1)).reshape(R, 1)
    b2 = jnp.tile(b[None, :], (N, 1)).reshape(R, 1)

    # 2-D view, NO padding: rows = (n, c), columns = spatial positions.
    x2 = x.reshape(R, HW)

    tile_r, tile_hw = _choose_tiles(R, HW)
    grid = (pl.cdiv(R, tile_r), pl.cdiv(HW, tile_hw))

    kernel = functools.partial(
        _rescale2d_q_kernel,
        qmin=qmin, qmax=qmax, inv_step=1.0 / step, quantize=quantize,
    )

    cost = pl.CostEstimate(
        flops=int(6 * R * HW),
        transcendentals=0,
        bytes_accessed=int(2 * R * HW * 4 + 2 * R * 4),
    )

    out2 = pl.pallas_call(
        kernel,
        out_shape=jax.ShapeDtypeStruct((R, HW), x.dtype),
        grid_spec=pltpu.PrefetchScalarGridSpec(
            num_scalar_prefetch=0,
            grid=grid,
            in_specs=[
                pl.BlockSpec((tile_r, tile_hw), lambda i, j: (i, j)),
                # Param blocks depend only on the row block index, so they stay
                # resident across the (inner) lane-block axis.
                pl.BlockSpec((tile_r, 1), lambda i, j: (i, 0)),
                pl.BlockSpec((tile_r, 1), lambda i, j: (i, 0)),
            ],
            out_specs=pl.BlockSpec((tile_r, tile_hw), lambda i, j: (i, j)),
        ),
        compiler_params=pltpu.CompilerParams(
            dimension_semantics=("parallel", "parallel"),
            vmem_limit_bytes=32 * 1024 * 1024,
        ),
        cost_estimate=cost,
    )(x2, w2, b2)

    return out2.reshape(N, C, H, W)


# ----------------------------------------------------------------------------
# Pure-JAX reference (mirrors the PyTorch forward)
# ----------------------------------------------------------------------------
def _reference(x, weight, bias, *, bits, step=2.0 ** (-5)):
    if bits == 32:
        q = lambda v: v
    else:
        qmin = -(2.0 ** (bits - 1))
        qmax = 2.0 ** (bits - 1) - 1.0
        q = lambda v: jnp.clip(jnp.round(v / step), qmin, qmax) * step
    return q(x) * q(weight)[None] + q(bias)[None]


if __name__ == "__main__":
    key = jax.random.PRNGKey(0)
    k1, k2, k3, k4, k5, k6, k7 = jax.random.split(key, 7)

    # --- Case 1: module defaults (reset_parameters: weight=1, bias=0),
    #     HW a multiple of 128, bits=8. ---
    N, C, H, W = 2, 4, 16, 16
    x = jax.random.normal(k1, (N, C, H, W), dtype=jnp.float32)
    weight = jnp.ones((C, 1, 1), dtype=jnp.float32)
    bias = jnp.zeros((C, 1, 1), dtype=jnp.float32)
    out = jax.block_until_ready(rescale2d_q(x, weight, bias, bits=8))
    ref = _reference(x, weight, bias, bits=8)
    assert out.shape == (N, C, H, W)
    assert jnp.allclose(out, ref, atol=1e-6, rtol=1e-6)

    # --- Case 2: random per-channel params, non-128-multiple HW
    #     (exercises masked edge stores with no wrapper padding), bits=8. ---
    N2, C2, H2, W2 = 2, 3, 7, 7
    x2 = jax.random.normal(k2, (N2, C2, H2, W2), dtype=jnp.float32)
    w2 = jax.random.normal(k3, (C2, 1, 1), dtype=jnp.float32)
    b2 = jax.random.normal(k4, (C2, 1, 1), dtype=jnp.float32)
    out2 = jax.block_until_ready(rescale2d_q(x2, w2, b2, bits=8))
    ref2 = _reference(x2, w2, b2, bits=8)
    assert out2.shape == (N2, C2, H2, W2)
    assert jnp.allclose(out2, ref2, atol=1e-6, rtol=1e-6)

    # --- Case 3: bits=32 path (no quantization). ---
    out3 = jax.block_until_ready(rescale2d_q(x2, w2, b2, bits=32))
    ref3 = _reference(x2, w2, b2, bits=32)
    assert jnp.allclose(out3, ref3, atol=1e-6, rtol=1e-6)

    # --- Case 4: medium shape (exercises the multi-block grid / row split). ---
    N4, C4, H4, W4 = 4, 32, 14, 14
    x4 = jax.random.normal(k5, (N4, C4, H4, W4), dtype=jnp.float32)
    w4 = jax.random.normal(k6, (C4, 1, 1), dtype=jnp.float32)
    b4 = jax.random.normal(k7, (C4, 1, 1), dtype=jnp.float32)
    out4 = jax.block_until_ready(rescale2d_q(x4, w4, b4, bits=8))
    ref4 = _reference(x4, w4, b4, bits=8)
    assert out4.shape == (N4, C4, H4, W4)
    assert jnp.allclose(out4, ref4, atol=1e-6, rtol=1e-6)

    # TODO(synk): backward-pass gradient quantization (GradQuantize /
    # dfxp_grad_quantize_backward) is not part of the forward pass and is not
    # implemented here.
    print("KERNEL_OK")
</pallas_src>

<mosaic_0001>
module attributes {stable_mosaic.version = 11 : i64} {
  func.func @_rescale2d_q_kernel(%arg0: i32, %arg1: i32, %arg2: memref<8x256xf32, #tpu.memory_space<vmem>>, %arg3: memref<8x1xf32, #tpu.memory_space<vmem>>, %arg4: memref<8x1xf32, #tpu.memory_space<vmem>>, %arg5: memref<8x256xf32, #tpu.memory_space<vmem>>) attributes {dimension_semantics = [#tpu.dimension_semantics<parallel>, #tpu.dimension_semantics<parallel>], iteration_bounds = array<i64: 1, 1>, scalar_prefetch = 0 : i64, scratch_operands = 0 : i64, tpu.core_type = #tpu.core_type<tc>, window_params = [{transform_indices = @transform_0, window_bounds = array<i64: 8, 256>}, {transform_indices = @transform_1, window_bounds = array<i64: 8, 1>}, {transform_indices = @transform_2, window_bounds = array<i64: 8, 1>}, {transform_indices = @transform_3, window_bounds = array<i64: 8, 256>}]} {
    %c0 = arith.constant 0 : index
    %c0_0 = arith.constant 0 : index
    %0 = vector.load %arg2[%c0, %c0_0] : memref<8x256xf32, #tpu.memory_space<vmem>>, vector<8x256xf32>
    %c0_1 = arith.constant 0 : index
    %c0_2 = arith.constant 0 : index
    %1 = vector.load %arg3[%c0_1, %c0_2] : memref<8x1xf32, #tpu.memory_space<vmem>>, vector<8x1xf32>
    %c0_3 = arith.constant 0 : index
    %c0_4 = arith.constant 0 : index
    %2 = vector.load %arg4[%c0_3, %c0_4] : memref<8x1xf32, #tpu.memory_space<vmem>>, vector<8x1xf32>
    %cst = arith.constant 3.200000e+01 : f32
    %3 = vector.broadcast %cst : f32 to vector<8x256xf32>
    %4 = arith.mulf %0, %3 : vector<8x256xf32>
    %5 = math.roundeven %4 : vector<8x256xf32>
    %cst_5 = arith.constant -1.280000e+02 : f32
    %cst_6 = arith.constant 1.270000e+02 : f32
    %6 = vector.broadcast %cst_5 : f32 to vector<8x256xf32>
    %7 = arith.maximumf %6, %5 : vector<8x256xf32>
    %8 = vector.broadcast %cst_6 : f32 to vector<8x256xf32>
    %9 = arith.minimumf %8, %7 : vector<8x256xf32>
    %10 = vector.broadcast %1 : vector<8x1xf32> to vector<8x256xf32>
    %11 = arith.mulf %9, %10 : vector<8x256xf32>
    %12 = vector.broadcast %2 : vector<8x1xf32> to vector<8x256xf32>
    %13 = arith.addf %11, %12 : vector<8x256xf32>
    %c0_7 = arith.constant 0 : index
    %c0_8 = arith.constant 0 : index
    %14 = vector.load %arg5[%c0_7, %c0_8] : memref<8x256xf32, #tpu.memory_space<vmem>>, vector<8x256xf32>
    tpu.vector_store %arg5[%c0_7, %c0_8], %13 {strides = array<i32>} : memref<8x256xf32, #tpu.memory_space<vmem>>, vector<8x256xf32>,
    return
  }
  func.func @transform_0(%arg0: i32, %arg1: i32) -> (i32, i32) {
    %c0_i32 = arith.constant 0 : i32
    return %arg0, %arg1 : i32, i32
  }
  func.func @transform_1(%arg0: i32, %arg1: i32) -> (i32, i32) {
    %c0_i32 = arith.constant 0 : i32
    %c0_i32_0 = arith.constant 0 : i32
    return %arg0, %c0_i32 : i32, i32
  }
  func.func @transform_2(%arg0: i32, %arg1: i32) -> (i32, i32) {
    %c0_i32 = arith.constant 0 : i32
    %c0_i32_0 = arith.constant 0 : i32
    return %arg0, %c0_i32 : i32, i32
  }
  func.func @transform_3(%arg0: i32, %arg1: i32) -> (i32, i32) {
    %c0_i32 = arith.constant 0 : i32
    return %arg0, %arg1 : i32, i32
  }
}

</mosaic_0001>

<llo_original>
// kernel: tpu_custom_call.1
$region0: #{tpu_custom_call.1}
  #allocation0 [shape = 'u32[]', space=smem, size = 0x4, offset = 0x4, fixed_abs, tag = 'smem constant byte address 0x4 - core index']
  #allocation1 [shape = 'u32[72,128]{1,0:T(1,128)}', space=vmem, size = 0x9000, scoped, tag = 'internal scratch']
  %s0 = inlined_call_operand.vmem [shape: f32[8,256], index: 0, kind: input, shape index: {}]
  %s1 = inlined_call_operand.vmem [shape: f32[8,1], index: 1, kind: input, shape index: {}]
  %s2 = inlined_call_operand.vmem [shape: f32[8,1], index: 2, kind: input, shape index: {}]
  %s3 = inlined_call_operand.hbm [shape: f32[8,256], index: 3, kind: output, shape index: {}]
  %s4 = sld [smem:[#allocation0]]
  $region22: #{tpu_custom_call.1} parent=0
    _
  %s6 = ssub.s32 1, %s4
  %s7 = scalar_select 0, %s6, %s4
  $region1: #{tpu_custom_call.1} parent=0
    #allocation2 [shape = 'u8[8192]{0}', space=vmem, size = 0x2000, scoped, tag = 'output window, operand 0, single buffered']
    #allocation3 [shape = 's32[1]{0}', space=sflag, size = 0x4, scoped, tag = 'scoped memory for tpu_custom_call.1']
    %8 = vsyncpa [#allocation3], 0
    // Predicated region
    $region2: #{tpu_custom_call.1} parent=1 // pred_check
      _
    $region3: #{tpu_custom_call.1} parent=1 // pred_check_branch
      %10 = sbr.rel (0) target = $region5
    $region4: #{tpu_custom_call.1} parent=1 // pred_region
      _
    $region5: #{tpu_custom_call.1} parent=1 // pred_fallthru
      _
    // Predicated region
    $region6: #{tpu_custom_call.1} parent=1 // pred_check
      _
    $region7: #{tpu_custom_call.1} parent=1 // pred_check_branch
      %12 = sbr.rel (0) target = $region9
    $region8: #{tpu_custom_call.1} parent=1 // pred_region
      _
    $region9: #{tpu_custom_call.1} parent=1 // pred_fallthru
      _
    // Predicated region
    $region10: #{tpu_custom_call.1} parent=1 // pred_check
      _
    $region11: #{tpu_custom_call.1} parent=1 // pred_check_branch
      %14 = sbr.rel (0) target = $region13
    $region12: #{tpu_custom_call.1} parent=1 // pred_region
      _
    $region13: #{tpu_custom_call.1} parent=1 // pred_fallthru
      _
    %v15 = vld [vmem:[%s0] sm:$0xff]
    %v16 = vld [vmem:[%s0 + $0x8] sm:$0xff]
    %v17 = vld [vmem:[%s1] sm:$0xff]
    %v18 = vld [vmem:[%s2] sm:$0xff]
    %v19 = vmul.f32 %v15, 32.0
    %v20 = vmul.f32 %v16, 32.0
    %v21 = vround.ne.pseudo %v19
    %v22 = vround.ne.pseudo %v20
    %v23 = vmax.f32 %v21, -128.0
    %v24 = vmax.f32 %v22, -128.0
    %v25 = vmin.f32 %v23, 127.0
    %v26 = vmin.f32 %v24, 127.0
    %28 = vset.pattern.permute.xlu0 0
    %29 = vperm.xlu0 %28, %v17
    %v30 = vpop.permute.xlu0 %29
    %v32 = vmul.f32 %v25, %v30
    %v33 = vmul.f32 %v26, %v30
    %35 = vset.pattern.permute.xlu0 0
    %36 = vperm.xlu0 %35, %v18
    %v37 = vpop.permute.xlu0 %36
    %v39 = vadd.f32 %v32, %v37
    %v40 = vadd.f32 %v33, %v37
    %41 = vst [vmem:[#allocation2] sm:$0xff] %v39
    %42 = vst [vmem:[#allocation2 + $0x8] sm:$0xff] %v40
    // Predicated region
    $region14: #{tpu_custom_call.1} parent=1 // pred_check
      _
    $region15: #{tpu_custom_call.1} parent=1 // pred_check_branch
      %44 = sbr.rel (0) target = $region17
    $region16: #{tpu_custom_call.1} parent=1 // pred_region
      %46 = vsyncadd [#allocation3], 0
      %s48 = sshll.u32 [#allocation2], 4
      %s49 = int_to_ptr.vmem [resolvable:$true] %s48
      %s50 = sshll.u32 %s3, 4
      %s51 = int_to_ptr.hbm [resolvable:$true] %s50
      %53 = dma.vmem_to_hbm [thread:$0]  %s49, 256, %s51, [#allocation3]
    $region17: #{tpu_custom_call.1} parent=1 // pred_fallthru
      _
    // Predicated region
    $region18: #{tpu_custom_call.1} parent=1 // pred_check
      _
    $region19: #{tpu_custom_call.1} parent=1 // pred_check_branch
      %55 = sbr.rel (0) target = $region21
    $region20: #{tpu_custom_call.1} parent=1 // pred_region
      %57 = dma.done [#allocation3], 256
    $region21: #{tpu_custom_call.1} parent=1 // pred_fallthru
      _
    %58 = vsyncpa [#allocation3], 1

</llo_original>
